<compile_context>
chip_gen: v7x
topology: tpu7x:2x2x1
jax: 0.10.0
libtpu: 0.0.40
codegen_flags: <defaults>
</compile_context>

<pallas_src>
import functools

import jax
import jax.numpy as jnp
from jax.experimental import pallas as pl
from jax.experimental.pallas import tpu as pltpu


# ---------------------------------------------------------------------------
# Kernel
# ---------------------------------------------------------------------------
def _focal_conv_kernel(x_ref, w_ref, o_ref, xpad_ref, *,
                       bs, hc, width, kh, kw, pad):
    """One grid step: 'same'-padded conv of `bs` height-chunks of one image.

    x_ref    : (1, Cin, bs*hc*width)        flat NCHW chunk group (lane-dense)
    w_ref    : (Cout, kh*kw*Cin)            per-tap weight columns (fetched once)
    o_ref    : (1, Cout, bs*hout*wout)      flat NCHW output block
    xpad_ref : (Cin, gl + bs*hp*width + gr) flat, H-padded scratch; W boundary
                                            handled by per-tap lane masks.
    """
    cin = x_ref.shape[1]
    cout = o_ref.shape[1]
    hp = hc + 2 * pad                      # H-padded rows per chunk
    hout = hc + 2 * pad - kh + 1
    wout = width + 2 * pad - kw + 1
    hw = hout * wout
    L = bs * hp * width                    # flat length the taps slide over
    gl = pad                               # left guard (only ever read masked)

    # ---- build the scratch: zero ONLY the H-halo rows, copy chunk interiors.
    # (Scratch is per-core and the grid axes are "parallel", so we refresh it
    #  every step; the halo rows are a few percent of the data, not 90%+.)
    if pad > 0:
        zrow = jnp.zeros((cin, pad * width), x_ref.dtype)
    for bi in range(bs):
        base = gl + bi * hp * width
        if pad > 0:
            xpad_ref[:, base:base + pad * width] = zrow                    # top halo
            xpad_ref[:, base + (pad + hc) * width:base + hp * width] = zrow  # bottom
        xpad_ref[:, base + pad * width:base + (pad + hc) * width] = \
            x_ref[0, :, bi * hc * width:(bi + 1) * hc * width]             # interior

    # ---- per-column-tap lane masks (W is not padded; out-of-row reads -> 0).
    col = jax.lax.broadcasted_iota(jnp.int32, (cin, L), 1) % width
    col_ok = {kx: (col >= (pad - kx)) & (col < (width + pad - kx))
              for kx in range(kw) if kx != pad}

    # ---- kh*kw shifted-slice GEMMs accumulated in vregs: no patch matrix, no
    #      accumulator scratch; the only remaining VMEM stores are the output.
    #      (MXU utilisation is irrelevant here -- see perf review item 7.)
    acc = jnp.zeros((cout, L), jnp.float32)
    for ky in range(kh):
        for kx in range(kw):
            off = ky * width + (kx - pad)
            sl = xpad_ref[:, gl + off:gl + off + L]            # (Cin, L) load
            if kx != pad:
                sl = jnp.where(col_ok[kx], sl, jnp.zeros_like(sl))
            t = ky * kw + kx
            wt = w_ref[:, t * cin:(t + 1) * cin]               # (Cout, Cin)
            acc = acc + jax.lax.dot_general(
                wt, sl, (((1,), (0,)), ((), ())),
                preferred_element_type=jnp.float32)

    # ---- write back the valid lanes of `acc`, already in flat-NCHW order.
    if wout == width:
        # "same"-width conv (the module's padding=1, k=3 case): each chunk's
        # valid region is a single contiguous lane range -> one store / chunk.
        for bi in range(bs):
            o_ref[0, :, bi * hw:(bi + 1) * hw] = \
                acc[:, bi * hp * width:bi * hp * width + hw].astype(o_ref.dtype)
    else:
        for bi in range(bs):
            for ho in range(hout):
                src = (bi * hp + ho) * width
                dst = bi * hw + ho * wout
                o_ref[0, :, dst:dst + wout] = \
                    acc[:, src:src + wout].astype(o_ref.dtype)


# ---------------------------------------------------------------------------
# Tile-size selection (generation aware)
# ---------------------------------------------------------------------------
def _tile_bytes(shape, dtype):
    """(8,128)-tile-padded VMEM footprint of one buffer, real element size."""
    s = list(shape)
    s[-1] = -(-s[-1] // 128) * 128
    if len(s) >= 2:
        s[-2] = -(-s[-2] // 8) * 8
    n = jnp.dtype(dtype).itemsize
    for d in s:
        n *= d
    return n


def _tpu_vmem_capacity():
    try:
        return int(pltpu.get_tpu_info().vmem_capacity_bytes)
    except Exception:
        return 64 * 2**20   # conservative default (v7x per-TensorCore VMEM)


def _tpu_num_cores():
    try:
        info = pltpu.get_tpu_info()
        for name in ("tensorcore_count", "num_tensorcores", "core_count",
                     "num_cores"):
            v = getattr(info, name, None)
            if isinstance(v, int) and 0 < v <= 16:
                return v
    except Exception:
        pass
    return 2   # assume up to 2 TCs/chip (v7x); harmless on 1-TC chips


def _choose_chunks_per_step(n, s, hc, width, cin, cout, kh, kw, pad, dtype,
                            vmem_budget, num_cores):
    """Chunks per grid step: lane-legal blocks, VMEM-safe, >=2 steps/core."""
    hout = hc + 2 * pad - kh + 1
    wout = width + 2 * pad - kw + 1
    hp = hc + 2 * pad

    def estimate(bs):
        L = bs * hp * width
        ltot = pad + L + (kh - 1) * width + (kw - 1)
        return (2 * _tile_bytes((1, cin, bs * hc * width), dtype)       # in (x2 buf)
                + 2 * _tile_bytes((1, cout, bs * hout * wout), dtype)   # out (x2 buf)
                + _tile_bytes((cout, kh * kw * cin), dtype)             # weight (x1)
                + _tile_bytes((cin, ltot), dtype)                       # halo scratch
                + _tile_bytes((cout, L), jnp.float32))                  # accumulator

    def shape_ok(bs):
        if bs == s:
            return True   # full-extent minor dims are always block-legal
        return (bs * hc * width) % 128 == 0 and (bs * hout * wout) % 128 == 0

    divisors = [d for d in range(1, s + 1) if s % d == 0]
    shape_legal = [d for d in divisors if shape_ok(d)]          # never empty
    fitting = [d for d in shape_legal if estimate(d) <= vmem_budget]
    if not fitting:
        # Nothing fits the budget: take the smallest legal footprint instead
        # of blindly returning the full extent (matters on v7x's 64 MiB VMEM).
        return min(shape_legal, key=estimate)
    total_chunks = n * s
    for min_steps in (2 * num_cores, 2, 1):
        cands = [d for d in fitting if total_chunks // d >= min_steps]
        if cands:
            return max(cands)
    return max(fitting)


# ---------------------------------------------------------------------------
# Wrapper
# ---------------------------------------------------------------------------
def focal_conv2d(x_nchw, weight, halving, padding=1):
    """FocalConv2d forward.  x: (N, Cin, H, W), weight: (Cout, Cin, KH, KW)."""
    n, cin, h, width = x_nchw.shape
    cout, cin_w, kh, kw = weight.shape
    assert cin == cin_w
    s = 1 if halving == 0 else 2 ** halving
    assert h % s == 0, "height must be divisible by 2**halving"
    hc = h // s
    hout = hc + 2 * padding - kh + 1
    wout = width + 2 * padding - kw + 1
    assert hout >= 1 and wout >= 1
    # TODO(synk): the flat shifted-slice scheme needs Wout <= W (i.e. the
    # usual kernel_size >= 2*padding+1); a W-padded scratch would cover the
    # exotic small-kernel case.
    assert wout <= width, "focal_conv2d kernel requires kernel_size >= 2*padding+1"
    hw = hout * wout
    hp = hc + 2 * padding

    vmem_cap = _tpu_vmem_capacity()
    vmem_limit = min(vmem_cap * 3 // 4, 100 * 2**20)   # ~96 MiB v5e/v6e, 48 MiB v7x
    num_cores = _tpu_num_cores()
    bs = _choose_chunks_per_step(n, s, hc, width, cin, cout, kh, kw, padding,
                                 x_nchw.dtype, vmem_limit // 2, num_cores)

    # Reshape-only views: no HBM transpose pass on input or output.
    x_flat = x_nchw.reshape(n, cin, h * width)
    # Tiny weight re-layout: (Cout, Cin, KH, KW) -> (Cout, KH*KW*Cin).
    w_taps = jnp.transpose(weight, (0, 2, 3, 1)).reshape(cout, kh * kw * cin)

    grid = (n, s // bs)
    scratch_lanes = padding + bs * hp * width + (kh - 1) * width + (kw - 1)

    kernel = functools.partial(_focal_conv_kernel, bs=bs, hc=hc, width=width,
                               kh=kh, kw=kw, pad=padding)

    out_flat = pl.pallas_call(
        kernel,
        out_shape=jax.ShapeDtypeStruct((n, cout, s * hw), x_nchw.dtype),
        grid=grid,
        in_specs=[
            # If profiling shows the input DMA exposed, pipeline_mode=pl.Buffered(3)
            # on this spec is a cheap experiment (perf review item 9).
            pl.BlockSpec((1, cin, bs * hc * width), lambda ni, si: (ni, 0, si)),
            pl.BlockSpec((cout, kh * kw * cin), lambda ni, si: (0, 0)),
        ],
        out_specs=pl.BlockSpec((1, cout, bs * hw), lambda ni, si: (ni, 0, si)),
        scratch_shapes=[pltpu.VMEM((cin, scratch_lanes), x_nchw.dtype)],
        compiler_params=pltpu.CompilerParams(
            dimension_semantics=("parallel", "parallel"),
            vmem_limit_bytes=int(vmem_limit),
        ),
    )(x_flat, w_taps)

    # Free view back to NCHW; chunks are already concatenated along H.
    return out_flat.reshape(n, cout, s * hout, wout)


# ---------------------------------------------------------------------------
# Pure-JAX reference mirroring the PyTorch forward
# ---------------------------------------------------------------------------
def _ref_focal_conv2d(x, weight, halving, padding=1):
    def conv(xx):
        return jax.lax.conv_general_dilated(
            xx, weight, window_strides=(1, 1),
            padding=[(padding, padding), (padding, padding)],
            dimension_numbers=('NCHW', 'OIHW', 'NCHW'))
    if halving == 0:
        return conv(x)
    s = 2 ** halving
    hc = x.shape[2] // s
    return jnp.concatenate(
        [conv(x[:, :, i * hc:(i + 1) * hc, :]) for i in range(s)], axis=2)


if __name__ == "__main__":
    N, CIN, COUT, H, W, K = 2, 4, 8, 16, 16, 3

    key = jax.random.PRNGKey(0)
    kx_, kw_ = jax.random.split(key)
    x = jax.random.normal(kx_, (N, CIN, H, W), dtype=jnp.float32)
    # Conv2d has bias=False, so weight only.
    weight = jax.random.normal(kw_, (COUT, CIN, K, K), dtype=jnp.float32) * 0.1

    for halving in (2, 0):  # exercise both the split path and the plain path
        out = jax.block_until_ready(focal_conv2d(x, weight, halving, padding=1))
        ref = _ref_focal_conv2d(x, weight, halving, padding=1)
        assert out.shape == ref.shape == (N, COUT, H, W), (out.shape, ref.shape)
        assert jnp.allclose(out, ref, atol=1e-4, rtol=1e-4), \
            f"mismatch halving={halving}"

    print("KERNEL_OK")
</pallas_src>

<mosaic_0001>
module attributes {stable_mosaic.version = 11 : i64} {
  func.func @_focal_conv_kernel(%arg0: i32, %arg1: i32, %arg2: memref<1x4x128xf32, #tpu.memory_space<vmem>>, %arg3: memref<8x36xf32, #tpu.memory_space<vmem>>, %arg4: memref<1x8x128xf32, #tpu.memory_space<vmem>>, %arg5: memref<4x227xf32, #tpu.memory_space<vmem>>) attributes {dimension_semantics = [#tpu.dimension_semantics<parallel>, #tpu.dimension_semantics<parallel>], iteration_bounds = array<i64: 2, 2>, scalar_prefetch = 0 : i64, scratch_operands = 1 : i64, tpu.core_type = #tpu.core_type<tc>, window_params = [{transform_indices = @transform_0, window_bounds = array<i64: 1, 4, 128>}, {pipeline_mode = #tpu.pipeline_mode<synchronous>, transform_indices = @transform_1, window_bounds = array<i64: 8, 36>}, {transform_indices = @transform_2, window_bounds = array<i64: 1, 8, 128>}]} {
    %cst = arith.constant 0.000000e+00 : f32
    %0 = vector.broadcast %cst : f32 to vector<4x16xf32>
    %c0 = arith.constant 0 : index
    %c1 = arith.constant 1 : index
    %1 = vector.load %arg5[%c0, %c1] : memref<4x227xf32, #tpu.memory_space<vmem>>, vector<4x16xf32>
    tpu.vector_store %arg5[%c0, %c1], %0 {strides = array<i32>} : memref<4x227xf32, #tpu.memory_space<vmem>>, vector<4x16xf32>,
    %c0_0 = arith.constant 0 : index
    %c81 = arith.constant 81 : index
    %2 = vector.load %arg5[%c0_0, %c81] : memref<4x227xf32, #tpu.memory_space<vmem>>, vector<4x16xf32>
    tpu.vector_store %arg5[%c0_0, %c81], %0 {strides = array<i32>} : memref<4x227xf32, #tpu.memory_space<vmem>>, vector<4x16xf32>,
    %c0_1 = arith.constant 0 : index
    %c0_2 = arith.constant 0 : index
    %c0_3 = arith.constant 0 : index
    %3 = vector.load %arg2[%c0_1, %c0_2, %c0_3] : memref<1x4x128xf32, #tpu.memory_space<vmem>>, vector<1x4x64xf32>
    %4 = vector.shape_cast %3 : vector<1x4x64xf32> to vector<4x64xf32>
    %c0_4 = arith.constant 0 : index
    %c17 = arith.constant 17 : index
    %5 = vector.load %arg5[%c0_4, %c17] : memref<4x227xf32, #tpu.memory_space<vmem>>, vector<4x64xf32>
    tpu.vector_store %arg5[%c0_4, %c17], %4 {strides = array<i32>} : memref<4x227xf32, #tpu.memory_space<vmem>>, vector<4x64xf32>,
    %c0_5 = arith.constant 0 : index
    %c97 = arith.constant 97 : index
    %6 = vector.load %arg5[%c0_5, %c97] : memref<4x227xf32, #tpu.memory_space<vmem>>, vector<4x16xf32>
    tpu.vector_store %arg5[%c0_5, %c97], %0 {strides = array<i32>} : memref<4x227xf32, #tpu.memory_space<vmem>>, vector<4x16xf32>,
    %c0_6 = arith.constant 0 : index
    %c177 = arith.constant 177 : index
    %7 = vector.load %arg5[%c0_6, %c177] : memref<4x227xf32, #tpu.memory_space<vmem>>, vector<4x16xf32>
    tpu.vector_store %arg5[%c0_6, %c177], %0 {strides = array<i32>} : memref<4x227xf32, #tpu.memory_space<vmem>>, vector<4x16xf32>,
    %c0_7 = arith.constant 0 : index
    %c0_8 = arith.constant 0 : index
    %c64 = arith.constant 64 : index
    %8 = vector.load %arg2[%c0_7, %c0_8, %c64] : memref<1x4x128xf32, #tpu.memory_space<vmem>>, vector<1x4x64xf32>
    %9 = vector.shape_cast %8 : vector<1x4x64xf32> to vector<4x64xf32>
    %c0_9 = arith.constant 0 : index
    %c113 = arith.constant 113 : index
    %10 = vector.load %arg5[%c0_9, %c113] : memref<4x227xf32, #tpu.memory_space<vmem>>, vector<4x64xf32>
    tpu.vector_store %arg5[%c0_9, %c113], %9 {strides = array<i32>} : memref<4x227xf32, #tpu.memory_space<vmem>>, vector<4x64xf32>,
    %11 = tpu.iota {dimensions = array<i32: 1>} : vector<4x192xi32>
    %c16_i32 = arith.constant 16 : i32
    %c0_i32 = arith.constant 0 : i32
    %12 = arith.cmpi eq, %c16_i32, %c0_i32 : i32
    %c1_i32 = arith.constant 1 : i32
    %13 = arith.select %12, %c1_i32, %c16_i32 : i32
    %14 = vector.broadcast %13 : i32 to vector<4x192xi32>
    %15 = arith.remsi %11, %14 : vector<4x192xi32>
    %c0_i32_10 = arith.constant 0 : i32
    %16 = vector.broadcast %c0_i32_10 : i32 to vector<4x192xi32>
    %17 = arith.cmpi ne, %15, %16 : vector<4x192xi32>
    %c0_i32_11 = arith.constant 0 : i32
    %18 = vector.broadcast %c0_i32_11 : i32 to vector<4x192xi32>
    %19 = arith.cmpi slt, %15, %18 : vector<4x192xi32>
    %c0_i32_12 = arith.constant 0 : i32
    %20 = arith.cmpi slt, %13, %c0_i32_12 : i32
    %21 = vector.broadcast %20 : i1 to vector<4x192xi1>
    %22 = vector.broadcast %21 : vector<4x192xi1> to vector<4x192xi1>
    %23 = arith.xori %19, %22 : vector<4x192xi1>
    %24 = arith.andi %23, %17 : vector<4x192xi1>
    %25 = vector.broadcast %13 : i32 to vector<4x192xi32>
    %26 = arith.addi %15, %25 : vector<4x192xi32>
    %27 = arith.select %24, %26, %15 : vector<4x192xi1>, vector<4x192xi32>
    %c1_i32_13 = arith.constant 1 : i32
    %28 = vector.broadcast %c1_i32_13 : i32 to vector<4x192xi32>
    %29 = arith.cmpi sge, %27, %28 : vector<4x192xi32>
    %c17_i32 = arith.constant 17 : i32
    %30 = vector.broadcast %c17_i32 : i32 to vector<4x192xi32>
    %31 = arith.cmpi slt, %27, %30 : vector<4x192xi32>
    %32 = arith.andi %29, %31 : vector<4x192xi1>
    %c-1_i32 = arith.constant -1 : i32
    %33 = vector.broadcast %c-1_i32 : i32 to vector<4x192xi32>
    %34 = arith.cmpi sge, %27, %33 : vector<4x192xi32>
    %c15_i32 = arith.constant 15 : i32
    %35 = vector.broadcast %c15_i32 : i32 to vector<4x192xi32>
    %36 = arith.cmpi slt, %27, %35 : vector<4x192xi32>
    %37 = arith.andi %34, %36 : vector<4x192xi1>
    %cst_14 = arith.constant 0.000000e+00 : f32
    %38 = vector.broadcast %cst_14 : f32 to vector<8x192xf32>
    %c0_15 = arith.constant 0 : index
    %c0_16 = arith.constant 0 : index
    %39 = vector.load %arg5[%c0_15, %c0_16] : memref<4x227xf32, #tpu.memory_space<vmem>>, vector<4x192xf32>
    %cst_17 = arith.constant 0.000000e+00 : f32
    %40 = vector.broadcast %cst_17 : f32 to vector<4x192xf32>
    %41 = arith.select %32, %39, %40 : vector<4x192xi1>, vector<4x192xf32>
    %c0_18 = arith.constant 0 : index
    %c0_19 = arith.constant 0 : index
    %42 = vector.load %arg3[%c0_18, %c0_19] : memref<8x36xf32, #tpu.memory_space<vmem>>, vector<8x4xf32>
    %cst_20 = arith.constant dense<0.000000e+00> : vector<8x192xf32>
    %43 = tpu.matmul %42, %41, %cst_20 {dimension_numbers = #tpu.dot_dimension_numbers<[1], [0], [0], [1], [0, 0, 1, 1], [], []>} : vector<8x4xf32>, vector<4x192xf32>, vector<8x192xf32> -> vector<8x192xf32>
    %44 = arith.addf %38, %43 : vector<8x192xf32>
    %c0_21 = arith.constant 0 : index
    %c1_22 = arith.constant 1 : index
    %45 = vector.load %arg5[%c0_21, %c1_22] : memref<4x227xf32, #tpu.memory_space<vmem>>, vector<4x192xf32>
    %c0_23 = arith.constant 0 : index
    %c4 = arith.constant 4 : index
    %46 = vector.load %arg3[%c0_23, %c4] : memref<8x36xf32, #tpu.memory_space<vmem>>, vector<8x4xf32>
    %cst_24 = arith.constant dense<0.000000e+00> : vector<8x192xf32>
    %47 = tpu.matmul %46, %45, %cst_24 {dimension_numbers = #tpu.dot_dimension_numbers<[1], [0], [0], [1], [0, 0, 1, 1], [], []>} : vector<8x4xf32>, vector<4x192xf32>, vector<8x192xf32> -> vector<8x192xf32>
    %48 = arith.addf %44, %47 : vector<8x192xf32>
    %c0_25 = arith.constant 0 : index
    %c2 = arith.constant 2 : index
    %49 = vector.load %arg5[%c0_25, %c2] : memref<4x227xf32, #tpu.memory_space<vmem>>, vector<4x192xf32>
    %cst_26 = arith.constant 0.000000e+00 : f32
    %50 = vector.broadcast %cst_26 : f32 to vector<4x192xf32>
    %51 = arith.select %37, %49, %50 : vector<4x192xi1>, vector<4x192xf32>
    %c0_27 = arith.constant 0 : index
    %c8 = arith.constant 8 : index
    %52 = vector.load %arg3[%c0_27, %c8] : memref<8x36xf32, #tpu.memory_space<vmem>>, vector<8x4xf32>
    %cst_28 = arith.constant dense<0.000000e+00> : vector<8x192xf32>
    %53 = tpu.matmul %52, %51, %cst_28 {dimension_numbers = #tpu.dot_dimension_numbers<[1], [0], [0], [1], [0, 0, 1, 1], [], []>} : vector<8x4xf32>, vector<4x192xf32>, vector<8x192xf32> -> vector<8x192xf32>
    %54 = arith.addf %48, %53 : vector<8x192xf32>
    %c0_29 = arith.constant 0 : index
    %c16 = arith.constant 16 : index
    %55 = vector.load %arg5[%c0_29, %c16] : memref<4x227xf32, #tpu.memory_space<vmem>>, vector<4x192xf32>
    %cst_30 = arith.constant 0.000000e+00 : f32
    %56 = vector.broadcast %cst_30 : f32 to vector<4x192xf32>
    %57 = arith.select %32, %55, %56 : vector<4x192xi1>, vector<4x192xf32>
    %c0_31 = arith.constant 0 : index
    %c12 = arith.constant 12 : index
    %58 = vector.load %arg3[%c0_31, %c12] : memref<8x36xf32, #tpu.memory_space<vmem>>, vector<8x4xf32>
    %cst_32 = arith.constant dense<0.000000e+00> : vector<8x192xf32>
    %59 = tpu.matmul %58, %57, %cst_32 {dimension_numbers = #tpu.dot_dimension_numbers<[1], [0], [0], [1], [0, 0, 1, 1], [], []>} : vector<8x4xf32>, vector<4x192xf32>, vector<8x192xf32> -> vector<8x192xf32>
    %60 = arith.addf %54, %59 : vector<8x192xf32>
    %c0_33 = arith.constant 0 : index
    %c17_34 = arith.constant 17 : index
    %61 = vector.load %arg5[%c0_33, %c17_34] : memref<4x227xf32, #tpu.memory_space<vmem>>, vector<4x192xf32>
    %c0_35 = arith.constant 0 : index
    %c16_36 = arith.constant 16 : index
    %62 = vector.load %arg3[%c0_35, %c16_36] : memref<8x36xf32, #tpu.memory_space<vmem>>, vector<8x4xf32>
    %cst_37 = arith.constant dense<0.000000e+00> : vector<8x192xf32>
    %63 = tpu.matmul %62, %61, %cst_37 {dimension_numbers = #tpu.dot_dimension_numbers<[1], [0], [0], [1], [0, 0, 1, 1], [], []>} : vector<8x4xf32>, vector<4x192xf32>, vector<8x192xf32> -> vector<8x192xf32>
    %64 = arith.addf %60, %63 : vector<8x192xf32>
    %c0_38 = arith.constant 0 : index
    %c18 = arith.constant 18 : index
    %65 = vector.load %arg5[%c0_38, %c18] : memref<4x227xf32, #tpu.memory_space<vmem>>, vector<4x192xf32>
    %cst_39 = arith.constant 0.000000e+00 : f32
    %66 = vector.broadcast %cst_39 : f32 to vector<4x192xf32>
    %67 = arith.select %37, %65, %66 : vector<4x192xi1>, vector<4x192xf32>
    %c0_40 = arith.constant 0 : index
    %c20 = arith.constant 20 : index
    %68 = vector.load %arg3[%c0_40, %c20] : memref<8x36xf32, #tpu.memory_space<vmem>>, vector<8x4xf32>
    %cst_41 = arith.constant dense<0.000000e+00> : vector<8x192xf32>
    %69 = tpu.matmul %68, %67, %cst_41 {dimension_numbers = #tpu.dot_dimension_numbers<[1], [0], [0], [1], [0, 0, 1, 1], [], []>} : vector<8x4xf32>, vector<4x192xf32>, vector<8x192xf32> -> vector<8x192xf32>
    %70 = arith.addf %64, %69 : vector<8x192xf32>
    %c0_42 = arith.constant 0 : index
    %c32 = arith.constant 32 : index
    %71 = vector.load %arg5[%c0_42, %c32] : memref<4x227xf32, #tpu.memory_space<vmem>>, vector<4x192xf32>
    %cst_43 = arith.constant 0.000000e+00 : f32
    %72 = vector.broadcast %cst_43 : f32 to vector<4x192xf32>
    %73 = arith.select %32, %71, %72 : vector<4x192xi1>, vector<4x192xf32>
    %c0_44 = arith.constant 0 : index
    %c24 = arith.constant 24 : index
    %74 = vector.load %arg3[%c0_44, %c24] : memref<8x36xf32, #tpu.memory_space<vmem>>, vector<8x4xf32>
    %cst_45 = arith.constant dense<0.000000e+00> : vector<8x192xf32>
    %75 = tpu.matmul %74, %73, %cst_45 {dimension_numbers = #tpu.dot_dimension_numbers<[1], [0], [0], [1], [0, 0, 1, 1], [], []>} : vector<8x4xf32>, vector<4x192xf32>, vector<8x192xf32> -> vector<8x192xf32>
    %76 = arith.addf %70, %75 : vector<8x192xf32>
    %c0_46 = arith.constant 0 : index
    %c33 = arith.constant 33 : index
    %77 = vector.load %arg5[%c0_46, %c33] : memref<4x227xf32, #tpu.memory_space<vmem>>, vector<4x192xf32>
    %c0_47 = arith.constant 0 : index
    %c28 = arith.constant 28 : index
    %78 = vector.load %arg3[%c0_47, %c28] : memref<8x36xf32, #tpu.memory_space<vmem>>, vector<8x4xf32>
    %cst_48 = arith.constant dense<0.000000e+00> : vector<8x192xf32>
    %79 = tpu.matmul %78, %77, %cst_48 {dimension_numbers = #tpu.dot_dimension_numbers<[1], [0], [0], [1], [0, 0, 1, 1], [], []>} : vector<8x4xf32>, vector<4x192xf32>, vector<8x192xf32> -> vector<8x192xf32>
    %80 = arith.addf %76, %79 : vector<8x192xf32>
    %c0_49 = arith.constant 0 : index
    %c34 = arith.constant 34 : index
    %81 = vector.load %arg5[%c0_49, %c34] : memref<4x227xf32, #tpu.memory_space<vmem>>, vector<4x192xf32>
    %cst_50 = arith.constant 0.000000e+00 : f32
    %82 = vector.broadcast %cst_50 : f32 to vector<4x192xf32>
    %83 = arith.select %37, %81, %82 : vector<4x192xi1>, vector<4x192xf32>
    %c0_51 = arith.constant 0 : index
    %c32_52 = arith.constant 32 : index
    %84 = vector.load %arg3[%c0_51, %c32_52] : memref<8x36xf32, #tpu.memory_space<vmem>>, vector<8x4xf32>
    %cst_53 = arith.constant dense<0.000000e+00> : vector<8x192xf32>
    %85 = tpu.matmul %84, %83, %cst_53 {dimension_numbers = #tpu.dot_dimension_numbers<[1], [0], [0], [1], [0, 0, 1, 1], [], []>} : vector<8x4xf32>, vector<4x192xf32>, vector<8x192xf32> -> vector<8x192xf32>
    %86 = arith.addf %80, %85 : vector<8x192xf32>
    %87 = vector.extract_strided_slice %86 {offsets = [0, 0], sizes = [8, 64], strides = [1, 1]} : vector<8x192xf32> to vector<8x64xf32>
    %c0_54 = arith.constant 0 : index
    %c0_55 = arith.constant 0 : index
    %c0_56 = arith.constant 0 : index
    %88 = vector.load %arg4[%c0_54, %c0_55, %c0_56] : memref<1x8x128xf32, #tpu.memory_space<vmem>>, vector<1x8x64xf32>
    %89 = vector.shape_cast %88 : vector<1x8x64xf32> to vector<8x64xf32>
    %90 = vector.shape_cast %87 : vector<8x64xf32> to vector<1x8x64xf32>
    tpu.vector_store %arg4[%c0_54, %c0_55, %c0_56], %90 {strides = array<i32>} : memref<1x8x128xf32, #tpu.memory_space<vmem>>, vector<1x8x64xf32>,
    %91 = vector.extract_strided_slice %86 {offsets = [0, 96], sizes = [8, 64], strides = [1, 1]} : vector<8x192xf32> to vector<8x64xf32>
    %c0_57 = arith.constant 0 : index
    %c0_58 = arith.constant 0 : index
    %c64_59 = arith.constant 64 : index
    %92 = vector.load %arg4[%c0_57, %c0_58, %c64_59] : memref<1x8x128xf32, #tpu.memory_space<vmem>>, vector<1x8x64xf32>
    %93 = vector.shape_cast %92 : vector<1x8x64xf32> to vector<8x64xf32>
    %94 = vector.shape_cast %91 : vector<8x64xf32> to vector<1x8x64xf32>
    tpu.vector_store %arg4[%c0_57, %c0_58, %c64_59], %94 {strides = array<i32>} : memref<1x8x128xf32, #tpu.memory_space<vmem>>, vector<1x8x64xf32>,
    return
  }
  func.func @transform_0(%arg0: i32, %arg1: i32) -> (i32, i32, i32) {
    %c0_i32 = arith.constant 0 : i32
    %c0_i32_0 = arith.constant 0 : i32
    return %arg0, %c0_i32, %arg1 : i32, i32, i32
  }
  func.func @transform_1(%arg0: i32, %arg1: i32) -> (i32, i32) {
    %c0_i32 = arith.constant 0 : i32
    %c0_i32_0 = arith.constant 0 : i32
    %c0_i32_1 = arith.constant 0 : i32
    return %c0_i32, %c0_i32_0 : i32, i32
  }
  func.func @transform_2(%arg0: i32, %arg1: i32) -> (i32, i32, i32) {
    %c0_i32 = arith.constant 0 : i32
    %c0_i32_0 = arith.constant 0 : i32
    return %arg0, %c0_i32, %arg1 : i32, i32, i32
  }
}

</mosaic_0001>

<llo_original>
// kernel: tpu_custom_call.1
$region0: #{tpu_custom_call.1}
  #allocation0 [shape = 'u32[]', space=smem, size = 0x4, offset = 0x4, fixed_abs, tag = 'smem constant byte address 0x4 - core index']
  #allocation1 [shape = 'u32[144,128]{1,0:T(1,128)}', space=vmem, size = 0x12000, scoped, tag = 'internal scratch']
  #allocation2 [shape = 'f32[4,227]{1,0:T(4,128)}', space=vmem, size = 0x1000, scoped, tag = 'scratch operand']
  %s0 = inlined_call_operand.hbm [shape: f32[2,4,256], index: 0, kind: input, shape index: {}]
  %s1 = inlined_call_operand.hbm [shape: f32[8,36], index: 1, kind: input, shape index: {}]
  %s2 = inlined_call_operand.hbm [shape: f32[2,8,256], index: 2, kind: output, shape index: {}]
  %s3 = sld [smem:[#allocation0]]
  $region49: #{tpu_custom_call.1} parent=0
    _
  %s5 = ssub.s32 1, %s3
  %s6 = scalar_select 0, %s5, %s3
  $region1: #{tpu_custom_call.1} parent=0
    #allocation3 [shape = 'u8[4096]{0}', space=vmem, size = 0x1000, scoped, tag = 'input window, operand 0']
    #allocation4 [shape = 's32[2]{0}', space=sflag, size = 0x8, scoped, tag = 'scoped memory for tpu_custom_call.1']
    #allocation5 [shape = 's32[2]{0}', space=sflag, size = 0x8, scoped, tag = 'scoped memory for tpu_custom_call.1']
    #allocation6 [shape = 'u8[4096]{0}', space=vmem, size = 0x1000, scoped, tag = 'input window, operand 1, single buffered']
    #allocation7 [shape = 's32[1]{0}', space=sflag, size = 0x4, scoped, tag = 'scoped memory for tpu_custom_call.1']
    #allocation8 [shape = 'u8[8192]{0}', space=vmem, size = 0x2000, scoped, tag = 'output window, operand 0']
    %7 = vsyncpa [#allocation4], 0
    %s8 = scalar_lea.sflag [#allocation4], 1
    %9 = vsyncpa %s8, 0
    %10 = vsyncpa [#allocation7], 0
    %11 = vsyncpa [#allocation5], 0
    %s12 = scalar_lea.sflag [#allocation5], 1
    %13 = vsyncpa %s12, 0
    loop: start=0, step=1, limit=6
    $region2: #{tpu_custom_call.1} parent=1 // loop_pre_header
      _
    $region3: #{tpu_custom_call.1} parent=1 // loop_header
      %s15 = sphi 0, %s19
      %p16 = scmp.ge.s32.totalorder %s15, 6
      %s22 = sphi 0, %s34
      %s23 = sphi 0, %s30
      %s24 = sphi 0, %s22
      %s25 = sphi 0, %s23
      %s26 = sphi 0, %s24
      %s27 = sphi 0, %s25
      %s39 = sphi 0, %s41
      %s42 = sphi 0, %s39
      %s43 = sphi 0, %s42
      %s59 = sphi 0, %s43
      %s63 = sphi 0, %s63
      %s65 = sphi 0, %s63
      %s66 = sphi 0, %s65
      %s80 = sphi 0, %s66
      %s88 = sphi 0, %s90
      %s91 = sphi 0, %s88
      %s92 = sphi 0, %s91
      %s108 = sphi 0, %s92
    $region4: #{tpu_custom_call.1} parent=1 // loop_header_branch
      %18 = sbr.rel (%p16) target = $region8
    $region5: #{tpu_custom_call.1} parent=1 // loop_body
      %s20 = ssub.s32 %s15, 1
      %s21 = ssub.s32 %s15, 2
      %s28 = sadd.s32 1, %s23
      %p29 = scmp.ge.s32.totalorder %s28, 2
      %s30 = scalar_select %p29, 0, %s28
      %s31 = sadd.s32 1, %s22
      %s32 = scalar_select %p29, %s31, %s22
      %p33 = scmp.ge.s32.totalorder %s32, 2
      %s34 = scalar_select %p33, 0, %s32
      %s35 = ssub.s32 %s22, %s34
      %s36 = ssub.s32 %s23, %s30
      %s37 = sor.u32 %s35, %s36
      %p38 = scmp.eq.s32.totalorder %s37, 0
      %s40 = sadd.s32 %s39, 1
      %s41 = scalar_select %p38, %s39, %s40
      %p44 = pneg %p38
      %p45 = scmp.eq.s32.totalorder %s15, 3
      %p46 = por %p44, %p45
      %p47 = scmp.ne.s32.totalorder %s39, %s42
      %p48 = scmp.eq.s32.totalorder %s15, 0
      %p49 = por %p47, %p48
      %p50 = scmp.ne.s32.totalorder %s39, %s42
      %p51 = scmp.eq.s32.totalorder %s20, 3
      %p52 = por %p50, %p51
      %p53 = scmp.ne.s32.totalorder %s42, %s43
      %p54 = scmp.eq.s32.totalorder %s20, 0
      %p55 = por %p53, %p54
      %p56 = scmp.ne.s32.totalorder %s42, %s43
      %p57 = scmp.eq.s32.totalorder %s21, 3
      %p58 = por %p56, %p57
      %p60 = scmp.ne.s32.totalorder %s43, %s59
      %p61 = scmp.eq.s32.totalorder %s21, 0
      %p62 = por %p60, %p61
      %s64 = sadd.s32 %s63, 1
      %p67 = scmp.eq.s32.totalorder %s15, 3
      %p68 = scmp.ne.s32.totalorder %s63, %s65
      %p69 = scmp.eq.s32.totalorder %s15, 0
      %p70 = por %p68, %p69
      %p71 = scmp.ne.s32.totalorder %s63, %s65
      %p72 = scmp.eq.s32.totalorder %s20, 3
      %p73 = por %p71, %p72
      %p74 = scmp.ne.s32.totalorder %s65, %s66
      %p75 = scmp.eq.s32.totalorder %s20, 0
      %p76 = por %p74, %p75
      %p77 = scmp.ne.s32.totalorder %s65, %s66
      %p78 = scmp.eq.s32.totalorder %s21, 3
      %p79 = por %p77, %p78
      %p81 = scmp.ne.s32.totalorder %s66, %s80
      %p82 = scmp.eq.s32.totalorder %s21, 0
      %p83 = por %p81, %p82
      %s84 = ssub.s32 %s22, %s34
      %s85 = ssub.s32 %s23, %s30
      %s86 = sor.u32 %s84, %s85
      %p87 = scmp.eq.s32.totalorder %s86, 0
      %s89 = sadd.s32 %s88, 1
      %s90 = scalar_select %p87, %s88, %s89
      %p93 = pneg %p87
      %p94 = scmp.eq.s32.totalorder %s15, 3
      %p95 = por %p93, %p94
      %p96 = scmp.ne.s32.totalorder %s88, %s91
      %p97 = scmp.eq.s32.totalorder %s15, 0
      %p98 = por %p96, %p97
      %p99 = scmp.ne.s32.totalorder %s88, %s91
      %p100 = scmp.eq.s32.totalorder %s20, 3
      %p101 = por %p99, %p100
      %p102 = scmp.ne.s32.totalorder %s91, %s92
      %p103 = scmp.eq.s32.totalorder %s20, 0
      %p104 = por %p102, %p103
      %p105 = scmp.ne.s32.totalorder %s91, %s92
      %p106 = scmp.eq.s32.totalorder %s21, 3
      %p107 = por %p105, %p106
      %p109 = scmp.ne.s32.totalorder %s92, %s108
      %p110 = scmp.eq.s32.totalorder %s21, 0
      %p111 = por %p109, %p110
      %p112 = scmp.le.s32.totalorder 1, %s15
      %p113 = scmp.lt.s32.totalorder %s15, 5
      %p114 = pnand %p112, %p113
      %p115 = pneg %p114
      // Predicated region
      $region9: #{tpu_custom_call.1} parent=5 // pred_check
        _
      $region10: #{tpu_custom_call.1} parent=5 // pred_check_branch
        %117 = sbr.rel (%p114) target = $region12
      $region11: #{tpu_custom_call.1} parent=5 // pred_region
        %s118 = ssub.s32 %s15, 1
        // Predicated region
        $region13: #{tpu_custom_call.1} parent=11 // pred_check
          %p119 = pneg %p76
        $region14: #{tpu_custom_call.1} parent=11 // pred_check_branch
          %121 = sbr.rel (%p119) target = $region16
        $region15: #{tpu_custom_call.1} parent=11 // pred_region
          %s123 = ssub.s32 128, 128
          %124 = vsyncadd [#allocation7], %s123
          %s126 = sshll.u32 [#allocation6], 4
          %s127 = int_to_ptr.vmem [resolvable:$true] %s126
          %129 = dma.hbm_to_vmem [thread:$0]  %s1, 128, %s127, [#allocation7]
        $region16: #{tpu_custom_call.1} parent=11 // pred_fallthru
          _
      $region12: #{tpu_custom_call.1} parent=5 // pred_fallthru
        _
      %p130 = scmp.lt.s32.totalorder %s15, 4
      // Predicated region
      $region17: #{tpu_custom_call.1} parent=5 // pred_check
        %p131 = pneg %p130
      $region18: #{tpu_custom_call.1} parent=5 // pred_check_branch
        %133 = sbr.rel (%p131) target = $region20
      $region19: #{tpu_custom_call.1} parent=5 // pred_region
        // Predicated region
        $region21: #{tpu_custom_call.1} parent=19 // pred_check
          %p134 = pneg %p49
        $region22: #{tpu_custom_call.1} parent=19 // pred_check_branch
          %136 = sbr.rel (%p134) target = $region24
        $region23: #{tpu_custom_call.1} parent=19 // pred_region
          %s137 = sand.u32 %s39, 1
          %s138 = scalar_lea.sflag [#allocation4], %s137
          %s139 = sand.u32 %s39, 1
          %s140 = smul.addr %s139, 4
          %s141 = scalar_lea.vmem [#allocation3], %s140
          %s143 = ssub.s32 64, 64
          %144 = vsyncadd %s138, %s143
          %s145 = smul.addr %s22, 2
          %s146 = sadd.s32 %s23, %s145
          %s147 = smul.addr %s146, 64
          %s148 = scalar_lea.hbm %s0, %s147
          %s150 = sshll.u32 %s141, 4
          %s151 = int_to_ptr.vmem [resolvable:$true] %s150
          %153 = dma.hbm_to_vmem [thread:$0]  %s148, 64, %s151, %s138
        $region24: #{tpu_custom_call.1} parent=19 // pred_fallthru
          _
      $region20: #{tpu_custom_call.1} parent=5 // pred_fallthru
        _
      %p154 = scmp.le.s32.totalorder 1, %s15
      %p155 = scmp.lt.s32.totalorder %s15, 5
      %p156 = pnand %p154, %p155
      %p157 = pneg %p156
      // Predicated region
      $region25: #{tpu_custom_call.1} parent=5 // pred_check
        _
      $region26: #{tpu_custom_call.1} parent=5 // pred_check_branch
        %159 = sbr.rel (%p156) target = $region28
      $region27: #{tpu_custom_call.1} parent=5 // pred_region
        %s160 = ssub.s32 %s15, 1
        %s161 = sand.u32 %s42, 1
        %s162 = scalar_lea.sflag [#allocation4], %s161
        %s163 = sand.u32 %s42, 1
        %s164 = smul.addr %s163, 4
        %s165 = scalar_lea.vmem [#allocation3], %s164
        // Predicated region
        $region29: #{tpu_custom_call.1} parent=27 // pred_check
          %p166 = pneg %p55
        $region30: #{tpu_custom_call.1} parent=27 // pred_check_branch
          %168 = sbr.rel (%p166) target = $region32
        $region31: #{tpu_custom_call.1} parent=27 // pred_region
          %169 = dma.done %s162, 64
        $region32: #{tpu_custom_call.1} parent=27 // pred_fallthru
          _
        // Predicated region
        $region33: #{tpu_custom_call.1} parent=27 // pred_check
          %p170 = pneg %p76
        $region34: #{tpu_custom_call.1} parent=27 // pred_check_branch
          %172 = sbr.rel (%p170) target = $region36
        $region35: #{tpu_custom_call.1} parent=27 // pred_region
          %173 = dma.done [#allocation7], 128
        $region36: #{tpu_custom_call.1} parent=27 // pred_fallthru
          _
        %s174 = sand.u32 %s42, 1
        %s175 = scalar_lea.sflag [#allocation4], %s174
        %s176 = sand.u32 %s42, 1
        %s177 = smul.addr %s176, 4
        %s178 = scalar_lea.vmem [#allocation3], %s177
        %p179 = pneg %p55
        %p180 = pneg %p52
        %p181 = pneg %p76
        %p182 = pneg %p73
        %p183 = pneg %p104
        %p184 = pneg %p101
        %s185 = sand.u32 %s91, 1
        %s186 = scalar_lea.sflag [#allocation5], %s185
        %s187 = sand.u32 %s91, 1
        %s188 = smul.addr %s187, 8
        %s189 = scalar_lea.vmem [#allocation8], %s188
        %vm190 = vcmask 134152
        %191 = vst.msk [vmem:[#allocation2] sm:$0xf] %vm190, 0.0
        %vm192 = vcmask 790152
        %193 = vst.msk [vmem:[#allocation2] sm:$0xf] %vm192, 0.0
        %v194 = vld [vmem:[%s165] sm:$0xf]
        %196 = vrot.lane.b32.xlu0 %v194, 17
        %v197 = vpop.permute.xlu0 %196
        %vm199 = vcmask 658568
        %200 = vst.msk [vmem:[#allocation2] sm:$0xf] %vm199, %v197
        %vm201 = vcmask 921352
        %202 = vst.msk [vmem:[#allocation2] sm:$0xf] %vm201, 0.0
        %vm203 = vcmask 527752
        %204 = vst.msk [vmem:[#allocation2 + $0x4] sm:$0xf] %vm203, 0.0
        %v205 = vld [vmem:[%s165] sm:$0xf]
        %207 = vrot.lane.b32.xlu0 %v205, 49
        %v208 = vpop.permute.xlu0 %207
        %v209 = vrot.slane %v208, 4
        %vm210 = vcmask 400384
        %v211 = vsel %vm210, %v209, %v208
        %vm213 = vcmask 1044360
        %vm214 = vcmask 400388
        %vm215 = vmor %vm214, %vm213
        %216 = vst.msk [vmem:[#allocation2] sm:$0xff] %vm215, %v211
        %v217 = vlaneseq
        %v218 = vand.u32 %v217, 127
        %v219 = vadd.s32 %v218, 128
        %vm220 = vcmp.lt.s32.totalorder %v218, 0
        %v221 = vsub.s32 0, %v218
        %v222 = vsel %vm220, %v221, %v218
        %v223 = vshrl.u32 %v222, 4
        %v224 = vand.u32 %v222, 15
        %v225 = vsub.s32 0, %v224
        %v226 = vsel %vm220, %v225, %v224
        %vm227 = vcmp.lt.s32.totalorder %v219, 0
        %v228 = vsub.s32 0, %v219
        %v229 = vsel %vm227, %v228, %v219
        %v230 = vshrl.u32 %v229, 4
        %v231 = vand.u32 %v229, 15
        %v232 = vsub.s32 0, %v231
        %v233 = vsel %vm227, %v232, %v231
        %vm234 = vcmp.ne.s32.totalorder %v226, 0
        %vm235 = vcmp.ne.s32.totalorder %v233, 0
        %vm236 = vcmp.lt.s32.totalorder %v226, 0
        %vm237 = vcmp.lt.s32.totalorder %v233, 0
        %vm238 = vmand %vm236, %vm234
        %vm239 = vmand %vm237, %vm235
        %v240 = vadd.s32 %v226, 16
        %v241 = vadd.s32 %v233, 16
        %v242 = vsel %vm238, %v240, %v226
        %v243 = vsel %vm239, %v241, %v233
        %vm244 = vcmp.ge.s32.totalorder %v242, 1
        %vm245 = vcmp.ge.s32.totalorder %v243, 1
        %vm246 = vcmp.lt.s32.totalorder %v242, 17
        %vm247 = vcmp.lt.s32.totalorder %v243, 17
        %vm248 = vmand %vm244, %vm246
        %vm249 = vmand %vm245, %vm247
        %vm250 = vcmp.ge.s32.totalorder %v242, 4294967295
        %vm251 = vcmp.ge.s32.totalorder %v243, 4294967295
        %vm252 = vcmp.lt.s32.totalorder %v242, 15
        %vm253 = vcmp.lt.s32.totalorder %v243, 15
        %vm254 = vmand %vm250, %vm252
        %vm255 = vmand %vm251, %vm253
        %v256 = vld [vmem:[#allocation2] sm:$0xff]
        %v258 = vcombine.high %v256, %v256
        %v260 = vsel %vm248, %v256, 0.0
        %v261 = vsel %vm249, %v258, 0.0
        %v262 = vld [vmem:[#allocation6] sm:$0xff]
        %264 = vrot.lane.b32.xlu0 %v262, 124
        %v265 = vpop.permute.xlu0 %264
        %266 = vrot.lane.b32.xlu0 %v256, 127
        %v267 = vpop.permute.xlu0 %266
        %268 = vrot.lane.b32.xlu0 %v258, 127
        %v269 = vpop.permute.xlu0 %268
        %vm270 = vcmask 1039360
        %v271 = vsel %vm270, %v267, %v269
        %vm272 = vcmask 31744
        %v273 = vsel %vm272, %v265, 0
        %vm275 = vcmask 1043456
        %v276 = vsel %vm275, %v271, 0
        %v278 = vsel %vm275, %v269, 0
        %280 = vmatprep.subr.mxu0 %v278
        %281 = vmatpush1.msra.mxu0 %v276
        %282 = vmatprep.subr.mxu0 0.0
        %283 = vmatpush1.msra.mxu0 0.0
        %284 = vmatprep.subr.mxu0 0.0
        %285 = vmatpush1.msra.mxu0 0.0
        %286 = vmatprep.subr.mxu0 0.0
        %287 = vmatpush1.msra.mxu0 0.0
        %288 = vmatprep.subr.mxu0 0.0
        %289 = vmatpush1.msra.mxu0 0.0
        %290 = vmatprep.subr.mxu0 0.0
        %291 = vmatpush1.msra.mxu0 0.0
        %292 = vmatprep.subr.mxu0 0.0
        %293 = vmatpush1.msra.mxu0 0.0
        %294 = vmatprep.subr.mxu0 0.0
        %295 = vmatpush1.msra.mxu0 0.0
        %296 = vmatprep.subr.mxu0 0.0
        %297 = vmatpush1.msra.mxu0 0.0
        %298 = vmatprep.subr.mxu0 0.0
        %299 = vmatpush1.msra.mxu0 0.0
        %300 = vmatprep.subr.mxu0 0.0
        %301 = vmatpush1.msra.mxu0 0.0
        %302 = vmatprep.subr.mxu0 0.0
        %303 = vmatpush1.msra.mxu0 0.0
        %304 = vmatprep.subr.mxu0 0.0
        %305 = vmatpush1.msra.mxu0 0.0
        %306 = vmatprep.subr.mxu0 0.0
        %307 = vmatpush1.msra.mxu0 0.0
        %308 = vmatprep.subr.mxu0 0.0
        %309 = vmatpush1.msra.mxu0 0.0
        %310 = vmatprep.subr.mxu0 0.0
        %311 = vmatpush1.msra.mxu0 0.0
        %312 = vmatprep.subr.mxu0 0.0
        %313 = vmatpush1.msra.mxu0 0.0
        %314 = vmatprep.subr.mxu0 0.0
        %315 = vmatpush1.msra.mxu0 0.0
        %316 = vmatprep.subr.mxu0 0.0
        %317 = vmatpush1.msra.mxu0 0.0
        %318 = vmatprep.subr.mxu0 0.0
        %319 = vmatpush1.msra.mxu0 0.0
        %320 = vmatprep.subr.mxu0 0.0
        %321 = vmatpush1.msra.mxu0 0.0
        %322 = vmatprep.subr.mxu0 0.0
        %323 = vmatpush1.msra.mxu0 0.0
        %324 = vmatprep.subr.mxu0 0.0
        %325 = vmatpush1.msra.mxu0 0.0
        %326 = vmatprep.subr.mxu0 0.0
        %327 = vmatpush1.msra.mxu0 0.0
        %328 = vmatprep.subr.mxu0 0.0
        %329 = vmatpush1.msra.mxu0 0.0
        %330 = vmatprep.subr.mxu0 0.0
        %331 = vmatpush1.msra.mxu0 0.0
        %332 = vmatprep.subr.mxu0 0.0
        %333 = vmatpush1.msra.mxu0 0.0
        %334 = vmatprep.subr.mxu0 0.0
        %335 = vmatpush1.msra.mxu0 0.0
        %336 = vmatprep.subr.mxu0 0.0
        %337 = vmatpush1.msra.mxu0 0.0
        %338 = vmatprep.subr.mxu0 0.0
        %339 = vmatpush1.msra.mxu0 0.0
        %340 = vmatprep.subr.mxu0 0.0
        %341 = vmatpush1.msra.mxu0 0.0
        %342 = vmatprep.subr.mxu0 0.0
        %343 = vmatpush1.msra.mxu0 0.0
        %344 = vmatprep.mubr.f32.mxu0 0.0
        %345 = vmatmul.mubr.f32.gmra.mrb[0].mxu0 %v273
        %v346 = vpop.f32.mrb[0].mxu0
        %v347 = vadd.f32 0.0, %v346
        %v348 = vpop.f32.mrb[0].mxu0
        %v349 = vadd.f32 0.0, %v348
        %350 = vdwg.mxu0
        %v351 = vsel %vm272, %v262, 0
        %v354 = vsel %vm275, %v260, 0
        %v357 = vsel %vm275, %v261, 0
        %359 = vmatprep.subr.mxu0 %v357
        %360 = vmatpush1.msra.mxu0 %v354
        %361 = vmatprep.subr.mxu0 0.0
        %362 = vmatpush1.msra.mxu0 0.0
        %363 = vmatprep.subr.mxu0 0.0
        %364 = vmatpush1.msra.mxu0 0.0
        %365 = vmatprep.subr.mxu0 0.0
        %366 = vmatpush1.msra.mxu0 0.0
        %367 = vmatprep.subr.mxu0 0.0
        %368 = vmatpush1.msra.mxu0 0.0
        %369 = vmatprep.subr.mxu0 0.0
        %370 = vmatpush1.msra.mxu0 0.0
        %371 = vmatprep.subr.mxu0 0.0
        %372 = vmatpush1.msra.mxu0 0.0
        %373 = vmatprep.subr.mxu0 0.0
        %374 = vmatpush1.msra.mxu0 0.0
        %375 = vmatprep.subr.mxu0 0.0
        %376 = vmatpush1.msra.mxu0 0.0
        %377 = vmatprep.subr.mxu0 0.0
        %378 = vmatpush1.msra.mxu0 0.0
        %379 = vmatprep.subr.mxu0 0.0
        %380 = vmatpush1.msra.mxu0 0.0
        %381 = vmatprep.subr.mxu0 0.0
        %382 = vmatpush1.msra.mxu0 0.0
        %383 = vmatprep.subr.mxu0 0.0
        %384 = vmatpush1.msra.mxu0 0.0
        %385 = vmatprep.subr.mxu0 0.0
        %386 = vmatpush1.msra.mxu0 0.0
        %387 = vmatprep.subr.mxu0 0.0
        %388 = vmatpush1.msra.mxu0 0.0
        %389 = vmatprep.subr.mxu0 0.0
        %390 = vmatpush1.msra.mxu0 0.0
        %391 = vmatprep.subr.mxu0 0.0
        %392 = vmatpush1.msra.mxu0 0.0
        %393 = vmatprep.subr.mxu0 0.0
        %394 = vmatpush1.msra.mxu0 0.0
        %395 = vmatprep.subr.mxu0 0.0
        %396 = vmatpush1.msra.mxu0 0.0
        %397 = vmatprep.subr.mxu0 0.0
        %398 = vmatpush1.msra.mxu0 0.0
        %399 = vmatprep.subr.mxu0 0.0
        %400 = vmatpush1.msra.mxu0 0.0
        %401 = vmatprep.subr.mxu0 0.0
        %402 = vmatpush1.msra.mxu0 0.0
        %403 = vmatprep.subr.mxu0 0.0
        %404 = vmatpush1.msra.mxu0 0.0
        %405 = vmatprep.subr.mxu0 0.0
        %406 = vmatpush1.msra.mxu0 0.0
        %407 = vmatprep.subr.mxu0 0.0
        %408 = vmatpush1.msra.mxu0 0.0
        %409 = vmatprep.subr.mxu0 0.0
        %410 = vmatpush1.msra.mxu0 0.0
        %411 = vmatprep.subr.mxu0 0.0
        %412 = vmatpush1.msra.mxu0 0.0
        %413 = vmatprep.subr.mxu0 0.0
        %414 = vmatpush1.msra.mxu0 0.0
        %415 = vmatprep.subr.mxu0 0.0
        %416 = vmatpush1.msra.mxu0 0.0
        %417 = vmatprep.subr.mxu0 0.0
        %418 = vmatpush1.msra.mxu0 0.0
        %419 = vmatprep.subr.mxu0 0.0
        %420 = vmatpush1.msra.mxu0 0.0
        %421 = vmatprep.subr.mxu0 0.0
        %422 = vmatpush1.msra.mxu0 0.0
        %423 = vmatprep.mubr.f32.mxu0 0.0
        %424 = vmatmul.mubr.f32.gmra.mrb[0].mxu0 %v351
        %v425 = vpop.f32.mrb[0].mxu0
        %v426 = vadd.f32 %v347, %v425
        %v427 = vpop.f32.mrb[0].mxu0
        %v428 = vadd.f32 %v349, %v427
        %429 = vdwg.mxu0
        %v430 = vld [vmem:[#allocation2] sm:$0xff]
        %v432 = vcombine.high %v430, %v430
        %433 = vrot.lane.b32.xlu0 %v430, 126
        %v434 = vpop.permute.xlu0 %433
        %435 = vrot.lane.b32.xlu0 %v432, 126
        %v436 = vpop.permute.xlu0 %435
        %vm437 = vcmask 1031168
        %v438 = vsel %vm437, %v434, %v436
        %v441 = vsel %vm254, %v438, 0.0
        %v442 = vsel %vm255, %v436, 0.0
        %v443 = vld [vmem:[#allocation6] sm:$0xff]
        %445 = vrot.lane.b32.xlu0 %v443, 120
        %v446 = vpop.permute.xlu0 %445
        %v447 = vsel %vm272, %v446, 0
        %v450 = vsel %vm275, %v441, 0
        %v453 = vsel %vm275, %v442, 0
        %455 = vmatprep.subr.mxu0 %v453
        %456 = vmatpush1.msra.mxu0 %v450
        %457 = vmatprep.subr.mxu0 0.0
        %458 = vmatpush1.msra.mxu0 0.0
        %459 = vmatprep.subr.mxu0 0.0
        %460 = vmatpush1.msra.mxu0 0.0
        %461 = vmatprep.subr.mxu0 0.0
        %462 = vmatpush1.msra.mxu0 0.0
        %463 = vmatprep.subr.mxu0 0.0
        %464 = vmatpush1.msra.mxu0 0.0
        %465 = vmatprep.subr.mxu0 0.0
        %466 = vmatpush1.msra.mxu0 0.0
        %467 = vmatprep.subr.mxu0 0.0
        %468 = vmatpush1.msra.mxu0 0.0
        %469 = vmatprep.subr.mxu0 0.0
        %470 = vmatpush1.msra.mxu0 0.0
        %471 = vmatprep.subr.mxu0 0.0
        %472 = vmatpush1.msra.mxu0 0.0
        %473 = vmatprep.subr.mxu0 0.0
        %474 = vmatpush1.msra.mxu0 0.0
        %475 = vmatprep.subr.mxu0 0.0
        %476 = vmatpush1.msra.mxu0 0.0
        %477 = vmatprep.subr.mxu0 0.0
        %478 = vmatpush1.msra.mxu0 0.0
        %479 = vmatprep.subr.mxu0 0.0
        %480 = vmatpush1.msra.mxu0 0.0
        %481 = vmatprep.subr.mxu0 0.0
        %482 = vmatpush1.msra.mxu0 0.0
        %483 = vmatprep.subr.mxu0 0.0
        %484 = vmatpush1.msra.mxu0 0.0
        %485 = vmatprep.subr.mxu0 0.0
        %486 = vmatpush1.msra.mxu0 0.0
        %487 = vmatprep.subr.mxu0 0.0
        %488 = vmatpush1.msra.mxu0 0.0
        %489 = vmatprep.subr.mxu0 0.0
        %490 = vmatpush1.msra.mxu0 0.0
        %491 = vmatprep.subr.mxu0 0.0
        %492 = vmatpush1.msra.mxu0 0.0
        %493 = vmatprep.subr.mxu0 0.0
        %494 = vmatpush1.msra.mxu0 0.0
        %495 = vmatprep.subr.mxu0 0.0
        %496 = vmatpush1.msra.mxu0 0.0
        %497 = vmatprep.subr.mxu0 0.0
        %498 = vmatpush1.msra.mxu0 0.0
        %499 = vmatprep.subr.mxu0 0.0
        %500 = vmatpush1.msra.mxu0 0.0
        %501 = vmatprep.subr.mxu0 0.0
        %502 = vmatpush1.msra.mxu0 0.0
        %503 = vmatprep.subr.mxu0 0.0
        %504 = vmatpush1.msra.mxu0 0.0
        %505 = vmatprep.subr.mxu0 0.0
        %506 = vmatpush1.msra.mxu0 0.0
        %507 = vmatprep.subr.mxu0 0.0
        %508 = vmatpush1.msra.mxu0 0.0
        %509 = vmatprep.subr.mxu0 0.0
        %510 = vmatpush1.msra.mxu0 0.0
        %511 = vmatprep.subr.mxu0 0.0
        %512 = vmatpush1.msra.mxu0 0.0
        %513 = vmatprep.subr.mxu0 0.0
        %514 = vmatpush1.msra.mxu0 0.0
        %515 = vmatprep.subr.mxu0 0.0
        %516 = vmatpush1.msra.mxu0 0.0
        %517 = vmatprep.subr.mxu0 0.0
        %518 = vmatpush1.msra.mxu0 0.0
        %519 = vmatprep.mubr.f32.mxu0 0.0
        %520 = vmatmul.mubr.f32.gmra.mrb[0].mxu0 %v447
        %v521 = vpop.f32.mrb[0].mxu0
        %v522 = vadd.f32 0.0, %v521
        %v523 = vpop.f32.mrb[0].mxu0
        %v524 = vadd.f32 0.0, %v523
        %525 = vdwg.mxu0
        %v526 = vadd.f32 %v426, %v522
        %v527 = vadd.f32 %v428, %v524
        %v528 = vld [vmem:[#allocation2] sm:$0xff]
        %v530 = vcombine.high %v528, %v528
        %531 = vrot.lane.b32.xlu0 %v528, 112
        %v532 = vpop.permute.xlu0 %531
        %533 = vrot.lane.b32.xlu0 %v530, 112
        %v534 = vpop.permute.xlu0 %533
        %vm535 = vcmask 916480
        %v536 = vsel %vm535, %v532, %v534
        %v539 = vsel %vm248, %v536, 0.0
        %v540 = vsel %vm249, %v534, 0.0
        %v541 = vld [vmem:[#allocation6] sm:$0xff]
        %543 = vrot.lane.b32.xlu0 %v541, 116
        %v544 = vpop.permute.xlu0 %543
        %v545 = vsel %vm272, %v544, 0
        %v548 = vsel %vm275, %v539, 0
        %v551 = vsel %vm275, %v540, 0
        %553 = vmatprep.subr.mxu0 %v551
        %554 = vmatpush1.msra.mxu0 %v548
        %555 = vmatprep.subr.mxu0 0.0
        %556 = vmatpush1.msra.mxu0 0.0
        %557 = vmatprep.subr.mxu0 0.0
        %558 = vmatpush1.msra.mxu0 0.0
        %559 = vmatprep.subr.mxu0 0.0
        %560 = vmatpush1.msra.mxu0 0.0
        %561 = vmatprep.subr.mxu0 0.0
        %562 = vmatpush1.msra.mxu0 0.0
        %563 = vmatprep.subr.mxu0 0.0
        %564 = vmatpush1.msra.mxu0 0.0
        %565 = vmatprep.subr.mxu0 0.0
        %566 = vmatpush1.msra.mxu0 0.0
        %567 = vmatprep.subr.mxu0 0.0
        %568 = vmatpush1.msra.mxu0 0.0
        %569 = vmatprep.subr.mxu0 0.0
        %570 = vmatpush1.msra.mxu0 0.0
        %571 = vmatprep.subr.mxu0 0.0
        %572 = vmatpush1.msra.mxu0 0.0
        %573 = vmatprep.subr.mxu0 0.0
        %574 = vmatpush1.msra.mxu0 0.0
        %575 = vmatprep.subr.mxu0 0.0
        %576 = vmatpush1.msra.mxu0 0.0
        %577 = vmatprep.subr.mxu0 0.0
        %578 = vmatpush1.msra.mxu0 0.0
        %579 = vmatprep.subr.mxu0 0.0
        %580 = vmatpush1.msra.mxu0 0.0
        %581 = vmatprep.subr.mxu0 0.0
        %582 = vmatpush1.msra.mxu0 0.0
        %583 = vmatprep.subr.mxu0 0.0
        %584 = vmatpush1.msra.mxu0 0.0
        %585 = vmatprep.subr.mxu0 0.0
        %586 = vmatpush1.msra.mxu0 0.0
        %587 = vmatprep.subr.mxu0 0.0
        %588 = vmatpush1.msra.mxu0 0.0
        %589 = vmatprep.subr.mxu0 0.0
        %590 = vmatpush1.msra.mxu0 0.0
        %591 = vmatprep.subr.mxu0 0.0
        %592 = vmatpush1.msra.mxu0 0.0
        %593 = vmatprep.subr.mxu0 0.0
        %594 = vmatpush1.msra.mxu0 0.0
        %595 = vmatprep.subr.mxu0 0.0
        %596 = vmatpush1.msra.mxu0 0.0
        %597 = vmatprep.subr.mxu0 0.0
        %598 = vmatpush1.msra.mxu0 0.0
        %599 = vmatprep.subr.mxu0 0.0
        %600 = vmatpush1.msra.mxu0 0.0
        %601 = vmatprep.subr.mxu0 0.0
        %602 = vmatpush1.msra.mxu0 0.0
        %603 = vmatprep.subr.mxu0 0.0
        %604 = vmatpush1.msra.mxu0 0.0
        %605 = vmatprep.subr.mxu0 0.0
        %606 = vmatpush1.msra.mxu0 0.0
        %607 = vmatprep.subr.mxu0 0.0
        %608 = vmatpush1.msra.mxu0 0.0
        %609 = vmatprep.subr.mxu0 0.0
        %610 = vmatpush1.msra.mxu0 0.0
        %611 = vmatprep.subr.mxu0 0.0
        %612 = vmatpush1.msra.mxu0 0.0
        %613 = vmatprep.subr.mxu0 0.0
        %614 = vmatpush1.msra.mxu0 0.0
        %615 = vmatprep.subr.mxu0 0.0
        %616 = vmatpush1.msra.mxu0 0.0
        %617 = vmatprep.mubr.f32.mxu0 0.0
        %618 = vmatmul.mubr.f32.gmra.mrb[0].mxu0 %v545
        %v619 = vpop.f32.mrb[0].mxu0
        %v620 = vadd.f32 0.0, %v619
        %v621 = vpop.f32.mrb[0].mxu0
        %v622 = vadd.f32 0.0, %v621
        %623 = vdwg.mxu0
        %v624 = vadd.f32 %v526, %v620
        %v625 = vadd.f32 %v527, %v622
        %v626 = vld [vmem:[#allocation2] sm:$0xff]
        %627 = vrot.lane.b32.xlu0 %v541, 112
        %v628 = vpop.permute.xlu0 %627
        %v630 = vcombine.high %v626, %v626
        %631 = vrot.lane.b32.xlu0 %v626, 111
        %v632 = vpop.permute.xlu0 %631
        %633 = vrot.lane.b32.xlu0 %v630, 111
        %v634 = vpop.permute.xlu0 %633
        %vm635 = vcmask 908288
        %v636 = vsel %vm635, %v632, %v634
        %v637 = vsel %vm272, %v628, 0
        %v639 = vsel %vm275, %v636, 0
        %v641 = vsel %vm275, %v634, 0
        %643 = vmatprep.subr.mxu0 %v641
        %644 = vmatpush1.msra.mxu0 %v639
        %645 = vmatprep.subr.mxu0 0.0
        %646 = vmatpush1.msra.mxu0 0.0
        %647 = vmatprep.subr.mxu0 0.0
        %648 = vmatpush1.msra.mxu0 0.0
        %649 = vmatprep.subr.mxu0 0.0
        %650 = vmatpush1.msra.mxu0 0.0
        %651 = vmatprep.subr.mxu0 0.0
        %652 = vmatpush1.msra.mxu0 0.0
        %653 = vmatprep.subr.mxu0 0.0
        %654 = vmatpush1.msra.mxu0 0.0
        %655 = vmatprep.subr.mxu0 0.0
        %656 = vmatpush1.msra.mxu0 0.0
        %657 = vmatprep.subr.mxu0 0.0
        %658 = vmatpush1.msra.mxu0 0.0
        %659 = vmatprep.subr.mxu0 0.0
        %660 = vmatpush1.msra.mxu0 0.0
        %661 = vmatprep.subr.mxu0 0.0
        %662 = vmatpush1.msra.mxu0 0.0
        %663 = vmatprep.subr.mxu0 0.0
        %664 = vmatpush1.msra.mxu0 0.0
        %665 = vmatprep.subr.mxu0 0.0
        %666 = vmatpush1.msra.mxu0 0.0
        %667 = vmatprep.subr.mxu0 0.0
        %668 = vmatpush1.msra.mxu0 0.0
        %669 = vmatprep.subr.mxu0 0.0
        %670 = vmatpush1.msra.mxu0 0.0
        %671 = vmatprep.subr.mxu0 0.0
        %672 = vmatpush1.msra.mxu0 0.0
        %673 = vmatprep.subr.mxu0 0.0
        %674 = vmatpush1.msra.mxu0 0.0
        %675 = vmatprep.subr.mxu0 0.0
        %676 = vmatpush1.msra.mxu0 0.0
        %677 = vmatprep.subr.mxu0 0.0
        %678 = vmatpush1.msra.mxu0 0.0
        %679 = vmatprep.subr.mxu0 0.0
        %680 = vmatpush1.msra.mxu0 0.0
        %681 = vmatprep.subr.mxu0 0.0
        %682 = vmatpush1.msra.mxu0 0.0
        %683 = vmatprep.subr.mxu0 0.0
        %684 = vmatpush1.msra.mxu0 0.0
        %685 = vmatprep.subr.mxu0 0.0
        %686 = vmatpush1.msra.mxu0 0.0
        %687 = vmatprep.subr.mxu0 0.0
        %688 = vmatpush1.msra.mxu0 0.0
        %689 = vmatprep.subr.mxu0 0.0
        %690 = vmatpush1.msra.mxu0 0.0
        %691 = vmatprep.subr.mxu0 0.0
        %692 = vmatpush1.msra.mxu0 0.0
        %693 = vmatprep.subr.mxu0 0.0
        %694 = vmatpush1.msra.mxu0 0.0
        %695 = vmatprep.subr.mxu0 0.0
        %696 = vmatpush1.msra.mxu0 0.0
        %697 = vmatprep.subr.mxu0 0.0
        %698 = vmatpush1.msra.mxu0 0.0
        %699 = vmatprep.subr.mxu0 0.0
        %700 = vmatpush1.msra.mxu0 0.0
        %701 = vmatprep.subr.mxu0 0.0
        %702 = vmatpush1.msra.mxu0 0.0
        %703 = vmatprep.subr.mxu0 0.0
        %704 = vmatpush1.msra.mxu0 0.0
        %705 = vmatprep.subr.mxu0 0.0
        %706 = vmatpush1.msra.mxu0 0.0
        %707 = vmatprep.mubr.f32.mxu0 0.0
        %708 = vmatmul.mubr.f32.gmra.mrb[0].mxu0 %v637
        %v709 = vpop.f32.mrb[0].mxu0
        %v710 = vadd.f32 0.0, %v709
        %v711 = vpop.f32.mrb[0].mxu0
        %v712 = vadd.f32 0.0, %v711
        %713 = vdwg.mxu0
        %v714 = vadd.f32 %v624, %v710
        %v715 = vadd.f32 %v625, %v712
        %v716 = vld [vmem:[#allocation2] sm:$0xff]
        %v718 = vcombine.high %v716, %v716
        %719 = vrot.lane.b32.xlu0 %v716, 110
        %v720 = vpop.permute.xlu0 %719
        %721 = vrot.lane.b32.xlu0 %v718, 110
        %v722 = vpop.permute.xlu0 %721
        %vm723 = vcmask 900096
        %v724 = vsel %vm723, %v720, %v722
        %v727 = vsel %vm254, %v724, 0.0
        %v728 = vsel %vm255, %v722, 0.0
        %v729 = vld [vmem:[#allocation6] sm:$0xff]
        %731 = vrot.lane.b32.xlu0 %v729, 108
        %v732 = vpop.permute.xlu0 %731
        %v733 = vsel %vm272, %v732, 0
        %v736 = vsel %vm275, %v727, 0
        %v739 = vsel %vm275, %v728, 0
        %741 = vmatprep.subr.mxu0 %v739
        %742 = vmatpush1.msra.mxu0 %v736
        %743 = vmatprep.subr.mxu0 0.0
        %744 = vmatpush1.msra.mxu0 0.0
        %745 = vmatprep.subr.mxu0 0.0
        %746 = vmatpush1.msra.mxu0 0.0
        %747 = vmatprep.subr.mxu0 0.0
        %748 = vmatpush1.msra.mxu0 0.0
        %749 = vmatprep.subr.mxu0 0.0
        %750 = vmatpush1.msra.mxu0 0.0
        %751 = vmatprep.subr.mxu0 0.0
        %752 = vmatpush1.msra.mxu0 0.0
        %753 = vmatprep.subr.mxu0 0.0
        %754 = vmatpush1.msra.mxu0 0.0
        %755 = vmatprep.subr.mxu0 0.0
        %756 = vmatpush1.msra.mxu0 0.0
        %757 = vmatprep.subr.mxu0 0.0
        %758 = vmatpush1.msra.mxu0 0.0
        %759 = vmatprep.subr.mxu0 0.0
        %760 = vmatpush1.msra.mxu0 0.0
        %761 = vmatprep.subr.mxu0 0.0
        %762 = vmatpush1.msra.mxu0 0.0
        %763 = vmatprep.subr.mxu0 0.0
        %764 = vmatpush1.msra.mxu0 0.0
        %765 = vmatprep.subr.mxu0 0.0
        %766 = vmatpush1.msra.mxu0 0.0
        %767 = vmatprep.subr.mxu0 0.0
        %768 = vmatpush1.msra.mxu0 0.0
        %769 = vmatprep.subr.mxu0 0.0
        %770 = vmatpush1.msra.mxu0 0.0
        %771 = vmatprep.subr.mxu0 0.0
        %772 = vmatpush1.msra.mxu0 0.0
        %773 = vmatprep.subr.mxu0 0.0
        %774 = vmatpush1.msra.mxu0 0.0
        %775 = vmatprep.subr.mxu0 0.0
        %776 = vmatpush1.msra.mxu0 0.0
        %777 = vmatprep.subr.mxu0 0.0
        %778 = vmatpush1.msra.mxu0 0.0
        %779 = vmatprep.subr.mxu0 0.0
        %780 = vmatpush1.msra.mxu0 0.0
        %781 = vmatprep.subr.mxu0 0.0
        %782 = vmatpush1.msra.mxu0 0.0
        %783 = vmatprep.subr.mxu0 0.0
        %784 = vmatpush1.msra.mxu0 0.0
        %785 = vmatprep.subr.mxu0 0.0
        %786 = vmatpush1.msra.mxu0 0.0
        %787 = vmatprep.subr.mxu0 0.0
        %788 = vmatpush1.msra.mxu0 0.0
        %789 = vmatprep.subr.mxu0 0.0
        %790 = vmatpush1.msra.mxu0 0.0
        %791 = vmatprep.subr.mxu0 0.0
        %792 = vmatpush1.msra.mxu0 0.0
        %793 = vmatprep.subr.mxu0 0.0
        %794 = vmatpush1.msra.mxu0 0.0
        %795 = vmatprep.subr.mxu0 0.0
        %796 = vmatpush1.msra.mxu0 0.0
        %797 = vmatprep.subr.mxu0 0.0
        %798 = vmatpush1.msra.mxu0 0.0
        %799 = vmatprep.subr.mxu0 0.0
        %800 = vmatpush1.msra.mxu0 0.0
        %801 = vmatprep.subr.mxu0 0.0
        %802 = vmatpush1.msra.mxu0 0.0
        %803 = vmatprep.subr.mxu0 0.0
        %804 = vmatpush1.msra.mxu0 0.0
        %805 = vmatprep.mubr.f32.mxu0 0.0
        %806 = vmatmul.mubr.f32.gmra.mrb[0].mxu0 %v733
        %v807 = vpop.f32.mrb[0].mxu0
        %v808 = vadd.f32 0.0, %v807
        %v809 = vpop.f32.mrb[0].mxu0
        %v810 = vadd.f32 0.0, %v809
        %811 = vdwg.mxu0
        %v812 = vadd.f32 %v714, %v808
        %v813 = vadd.f32 %v715, %v810
        %v814 = vld [vmem:[#allocation2] sm:$0xff]
        %v816 = vcombine.high %v814, %v814
        %817 = vrot.lane.b32.xlu0 %v814, 96
        %v818 = vpop.permute.xlu0 %817
        %819 = vrot.lane.b32.xlu0 %v816, 96
        %v820 = vpop.permute.xlu0 %819
        %vm821 = vcmask 785408
        %v822 = vsel %vm821, %v818, %v820
        %v825 = vsel %vm248, %v822, 0.0
        %v826 = vsel %vm249, %v820, 0.0
        %v827 = vld [vmem:[#allocation6] sm:$0xff]
        %829 = vrot.lane.b32.xlu0 %v827, 104
        %v830 = vpop.permute.xlu0 %829
        %v831 = vsel %vm272, %v830, 0
        %v834 = vsel %vm275, %v825, 0
        %v837 = vsel %vm275, %v826, 0
        %839 = vmatprep.subr.mxu0 %v837
        %840 = vmatpush1.msra.mxu0 %v834
        %841 = vmatprep.subr.mxu0 0.0
        %842 = vmatpush1.msra.mxu0 0.0
        %843 = vmatprep.subr.mxu0 0.0
        %844 = vmatpush1.msra.mxu0 0.0
        %845 = vmatprep.subr.mxu0 0.0
        %846 = vmatpush1.msra.mxu0 0.0
        %847 = vmatprep.subr.mxu0 0.0
        %848 = vmatpush1.msra.mxu0 0.0
        %849 = vmatprep.subr.mxu0 0.0
        %850 = vmatpush1.msra.mxu0 0.0
        %851 = vmatprep.subr.mxu0 0.0
        %852 = vmatpush1.msra.mxu0 0.0
        %853 = vmatprep.subr.mxu0 0.0
        %854 = vmatpush1.msra.mxu0 0.0
        %855 = vmatprep.subr.mxu0 0.0
        %856 = vmatpush1.msra.mxu0 0.0
        %857 = vmatprep.subr.mxu0 0.0
        %858 = vmatpush1.msra.mxu0 0.0
        %859 = vmatprep.subr.mxu0 0.0
        %860 = vmatpush1.msra.mxu0 0.0
        %861 = vmatprep.subr.mxu0 0.0
        %862 = vmatpush1.msra.mxu0 0.0
        %863 = vmatprep.subr.mxu0 0.0
        %864 = vmatpush1.msra.mxu0 0.0
        %865 = vmatprep.subr.mxu0 0.0
        %866 = vmatpush1.msra.mxu0 0.0
        %867 = vmatprep.subr.mxu0 0.0
        %868 = vmatpush1.msra.mxu0 0.0
        %869 = vmatprep.subr.mxu0 0.0
        %870 = vmatpush1.msra.mxu0 0.0
        %871 = vmatprep.subr.mxu0 0.0
        %872 = vmatpush1.msra.mxu0 0.0
        %873 = vmatprep.subr.mxu0 0.0
        %874 = vmatpush1.msra.mxu0 0.0
        %875 = vmatprep.subr.mxu0 0.0
        %876 = vmatpush1.msra.mxu0 0.0
        %877 = vmatprep.subr.mxu0 0.0
        %878 = vmatpush1.msra.mxu0 0.0
        %879 = vmatprep.subr.mxu0 0.0
        %880 = vmatpush1.msra.mxu0 0.0
        %881 = vmatprep.subr.mxu0 0.0
        %882 = vmatpush1.msra.mxu0 0.0
        %883 = vmatprep.subr.mxu0 0.0
        %884 = vmatpush1.msra.mxu0 0.0
        %885 = vmatprep.subr.mxu0 0.0
        %886 = vmatpush1.msra.mxu0 0.0
        %887 = vmatprep.subr.mxu0 0.0
        %888 = vmatpush1.msra.mxu0 0.0
        %889 = vmatprep.subr.mxu0 0.0
        %890 = vmatpush1.msra.mxu0 0.0
        %891 = vmatprep.subr.mxu0 0.0
        %892 = vmatpush1.msra.mxu0 0.0
        %893 = vmatprep.subr.mxu0 0.0
        %894 = vmatpush1.msra.mxu0 0.0
        %895 = vmatprep.subr.mxu0 0.0
        %896 = vmatpush1.msra.mxu0 0.0
        %897 = vmatprep.subr.mxu0 0.0
        %898 = vmatpush1.msra.mxu0 0.0
        %899 = vmatprep.subr.mxu0 0.0
        %900 = vmatpush1.msra.mxu0 0.0
        %901 = vmatprep.subr.mxu0 0.0
        %902 = vmatpush1.msra.mxu0 0.0
        %903 = vmatprep.mubr.f32.mxu0 0.0
        %904 = vmatmul.mubr.f32.gmra.mrb[0].mxu0 %v831
        %v905 = vpop.f32.mrb[0].mxu0
        %v906 = vadd.f32 0.0, %v905
        %v907 = vpop.f32.mrb[0].mxu0
        %v908 = vadd.f32 0.0, %v907
        %909 = vdwg.mxu0
        %v910 = vadd.f32 %v812, %v906
        %v911 = vadd.f32 %v813, %v908
        %v912 = vld [vmem:[#allocation2] sm:$0xff]
        %913 = vrot.lane.b32.xlu0 %v827, 100
        %v914 = vpop.permute.xlu0 %913
        %v916 = vcombine.high %v912, %v912
        %917 = vrot.lane.b32.xlu0 %v912, 95
        %v918 = vpop.permute.xlu0 %917
        %919 = vrot.lane.b32.xlu0 %v916, 95
        %v920 = vpop.permute.xlu0 %919
        %vm921 = vcmask 777216
        %v922 = vsel %vm921, %v918, %v920
        %v923 = vsel %vm272, %v914, 0
        %v925 = vsel %vm275, %v922, 0
        %v927 = vsel %vm275, %v920, 0
        %929 = vmatprep.subr.mxu0 %v927
        %930 = vmatpush1.msra.mxu0 %v925
        %931 = vmatprep.subr.mxu0 0.0
        %932 = vmatpush1.msra.mxu0 0.0
        %933 = vmatprep.subr.mxu0 0.0
        %934 = vmatpush1.msra.mxu0 0.0
        %935 = vmatprep.subr.mxu0 0.0
        %936 = vmatpush1.msra.mxu0 0.0
        %937 = vmatprep.subr.mxu0 0.0
        %938 = vmatpush1.msra.mxu0 0.0
        %939 = vmatprep.subr.mxu0 0.0
        %940 = vmatpush1.msra.mxu0 0.0
        %941 = vmatprep.subr.mxu0 0.0
        %942 = vmatpush1.msra.mxu0 0.0
        %943 = vmatprep.subr.mxu0 0.0
        %944 = vmatpush1.msra.mxu0 0.0
        %945 = vmatprep.subr.mxu0 0.0
        %946 = vmatpush1.msra.mxu0 0.0
        %947 = vmatprep.subr.mxu0 0.0
        %948 = vmatpush1.msra.mxu0 0.0
        %949 = vmatprep.subr.mxu0 0.0
        %950 = vmatpush1.msra.mxu0 0.0
        %951 = vmatprep.subr.mxu0 0.0
        %952 = vmatpush1.msra.mxu0 0.0
        %953 = vmatprep.subr.mxu0 0.0
        %954 = vmatpush1.msra.mxu0 0.0
        %955 = vmatprep.subr.mxu0 0.0
        %956 = vmatpush1.msra.mxu0 0.0
        %957 = vmatprep.subr.mxu0 0.0
        %958 = vmatpush1.msra.mxu0 0.0
        %959 = vmatprep.subr.mxu0 0.0
        %960 = vmatpush1.msra.mxu0 0.0
        %961 = vmatprep.subr.mxu0 0.0
        %962 = vmatpush1.msra.mxu0 0.0
        %963 = vmatprep.subr.mxu0 0.0
        %964 = vmatpush1.msra.mxu0 0.0
        %965 = vmatprep.subr.mxu0 0.0
        %966 = vmatpush1.msra.mxu0 0.0
        %967 = vmatprep.subr.mxu0 0.0
        %968 = vmatpush1.msra.mxu0 0.0
        %969 = vmatprep.subr.mxu0 0.0
        %970 = vmatpush1.msra.mxu0 0.0
        %971 = vmatprep.subr.mxu0 0.0
        %972 = vmatpush1.msra.mxu0 0.0
        %973 = vmatprep.subr.mxu0 0.0
        %974 = vmatpush1.msra.mxu0 0.0
        %975 = vmatprep.subr.mxu0 0.0
        %976 = vmatpush1.msra.mxu0 0.0
        %977 = vmatprep.subr.mxu0 0.0
        %978 = vmatpush1.msra.mxu0 0.0
        %979 = vmatprep.subr.mxu0 0.0
        %980 = vmatpush1.msra.mxu0 0.0
        %981 = vmatprep.subr.mxu0 0.0
        %982 = vmatpush1.msra.mxu0 0.0
        %983 = vmatprep.subr.mxu0 0.0
        %984 = vmatpush1.msra.mxu0 0.0
        %985 = vmatprep.subr.mxu0 0.0
        %986 = vmatpush1.msra.mxu0 0.0
        %987 = vmatprep.subr.mxu0 0.0
        %988 = vmatpush1.msra.mxu0 0.0
        %989 = vmatprep.subr.mxu0 0.0
        %990 = vmatpush1.msra.mxu0 0.0
        %991 = vmatprep.subr.mxu0 0.0
        %992 = vmatpush1.msra.mxu0 0.0
        %993 = vmatprep.mubr.f32.mxu0 0.0
        %994 = vmatmul.mubr.f32.gmra.mrb[0].mxu0 %v923
        %v995 = vpop.f32.mrb[0].mxu0
        %v996 = vadd.f32 0.0, %v995
        %v997 = vpop.f32.mrb[0].mxu0
        %v998 = vadd.f32 0.0, %v997
        %999 = vdwg.mxu0
        %v1000 = vadd.f32 %v910, %v996
        %v1001 = vadd.f32 %v911, %v998
        %v1002 = vld [vmem:[#allocation2] sm:$0xff]
        %v1004 = vcombine.high %v1002, %v1002
        %1005 = vrot.lane.b32.xlu0 %v1002, 94
        %v1006 = vpop.permute.xlu0 %1005
        %1007 = vrot.lane.b32.xlu0 %v1004, 94
        %v1008 = vpop.permute.xlu0 %1007
        %vm1009 = vcmask 769024
        %v1010 = vsel %vm1009, %v1006, %v1008
        %v1013 = vsel %vm254, %v1010, 0.0
        %v1014 = vsel %vm255, %v1008, 0.0
        %v1015 = vld [vmem:[#allocation6] sm:$0xff]
        %1017 = vrot.lane.b32.xlu0 %v1015, 96
        %v1018 = vpop.permute.xlu0 %1017
        %v1019 = vsel %vm272, %v1018, 0
        %v1022 = vsel %vm275, %v1013, 0
        %v1025 = vsel %vm275, %v1014, 0
        %1027 = vmatprep.subr.mxu0 %v1025
        %1028 = vmatpush1.msra.mxu0 %v1022
        %1029 = vmatprep.subr.mxu0 0.0
        %1030 = vmatpush1.msra.mxu0 0.0
        %1031 = vmatprep.subr.mxu0 0.0
        %1032 = vmatpush1.msra.mxu0 0.0
        %1033 = vmatprep.subr.mxu0 0.0
        %1034 = vmatpush1.msra.mxu0 0.0
        %1035 = vmatprep.subr.mxu0 0.0
        %1036 = vmatpush1.msra.mxu0 0.0
        %1037 = vmatprep.subr.mxu0 0.0
        %1038 = vmatpush1.msra.mxu0 0.0
        %1039 = vmatprep.subr.mxu0 0.0
        %1040 = vmatpush1.msra.mxu0 0.0
        %1041 = vmatprep.subr.mxu0 0.0
        %1042 = vmatpush1.msra.mxu0 0.0
        %1043 = vmatprep.subr.mxu0 0.0
        %1044 = vmatpush1.msra.mxu0 0.0
        %1045 = vmatprep.subr.mxu0 0.0
        %1046 = vmatpush1.msra.mxu0 0.0
        %1047 = vmatprep.subr.mxu0 0.0
        %1048 = vmatpush1.msra.mxu0 0.0
        %1049 = vmatprep.subr.mxu0 0.0
        %1050 = vmatpush1.msra.mxu0 0.0
        %1051 = vmatprep.subr.mxu0 0.0
        %1052 = vmatpush1.msra.mxu0 0.0
        %1053 = vmatprep.subr.mxu0 0.0
        %1054 = vmatpush1.msra.mxu0 0.0
        %1055 = vmatprep.subr.mxu0 0.0
        %1056 = vmatpush1.msra.mxu0 0.0
        %1057 = vmatprep.subr.mxu0 0.0
        %1058 = vmatpush1.msra.mxu0 0.0
        %1059 = vmatprep.subr.mxu0 0.0
        %1060 = vmatpush1.msra.mxu0 0.0
        %1061 = vmatprep.subr.mxu0 0.0
        %1062 = vmatpush1.msra.mxu0 0.0
        %1063 = vmatprep.subr.mxu0 0.0
        %1064 = vmatpush1.msra.mxu0 0.0
        %1065 = vmatprep.subr.mxu0 0.0
        %1066 = vmatpush1.msra.mxu0 0.0
        %1067 = vmatprep.subr.mxu0 0.0
        %1068 = vmatpush1.msra.mxu0 0.0
        %1069 = vmatprep.subr.mxu0 0.0
        %1070 = vmatpush1.msra.mxu0 0.0
        %1071 = vmatprep.subr.mxu0 0.0
        %1072 = vmatpush1.msra.mxu0 0.0
        %1073 = vmatprep.subr.mxu0 0.0
        %1074 = vmatpush1.msra.mxu0 0.0
        %1075 = vmatprep.subr.mxu0 0.0
        %1076 = vmatpush1.msra.mxu0 0.0
        %1077 = vmatprep.subr.mxu0 0.0
        %1078 = vmatpush1.msra.mxu0 0.0
        %1079 = vmatprep.subr.mxu0 0.0
        %1080 = vmatpush1.msra.mxu0 0.0
        %1081 = vmatprep.subr.mxu0 0.0
        %1082 = vmatpush1.msra.mxu0 0.0
        %1083 = vmatprep.subr.mxu0 0.0
        %1084 = vmatpush1.msra.mxu0 0.0
        %1085 = vmatprep.subr.mxu0 0.0
        %1086 = vmatpush1.msra.mxu0 0.0
        %1087 = vmatprep.subr.mxu0 0.0
        %1088 = vmatpush1.msra.mxu0 0.0
        %1089 = vmatprep.subr.mxu0 0.0
        %1090 = vmatpush1.msra.mxu0 0.0
        %1091 = vmatprep.mubr.f32.mxu0 0.0
        %1092 = vmatmul.mubr.f32.gmra.mrb[0].mxu0 %v1019
        %v1093 = vpop.f32.mrb[0].mxu0
        %v1094 = vadd.f32 0.0, %v1093
        %v1095 = vpop.f32.mrb[0].mxu0
        %v1096 = vadd.f32 0.0, %v1095
        %1097 = vdwg.mxu0
        %v1098 = vadd.f32 %v1000, %v1094
        %v1099 = vadd.f32 %v1001, %v1096
        %vm1100 = vcmask 523264
        %1101 = vst.msk [vmem:[%s189] sm:$0xff] %vm1100, %v1098
        %1104 = vrot.lane.b32.xlu0 %v1098, 96
        %v1105 = vpop.permute.xlu0 %1104
        %1106 = vrot.lane.b32.xlu0 %v1099, 96
        %v1107 = vpop.permute.xlu0 %1106
        %v1108 = vsel %vm821, %v1105, %v1107
        %vm1110 = vcmask 1048064
        %1111 = vst.msk [vmem:[%s189] sm:$0xff] %vm1110, %v1108
        %s1112 = sand.u32 %s91, 1
        %s1113 = scalar_lea.sflag [#allocation5], %s1112
        %s1114 = sand.u32 %s91, 1
        %s1115 = smul.addr %s1114, 8
        %s1116 = scalar_lea.vmem [#allocation8], %s1115
        // Predicated region
        $region37: #{tpu_custom_call.1} parent=27 // pred_check
          %p1117 = pneg %p101
        $region38: #{tpu_custom_call.1} parent=27 // pred_check_branch
          %1119 = sbr.rel (%p1117) target = $region40
        $region39: #{tpu_custom_call.1} parent=27 // pred_region
          %s1121 = ssub.s32 128, 128
          %1122 = vsyncadd %s1113, %s1121
          %s1123 = smul.addr %s24, 2
          %s1124 = sadd.s32 %s25, %s1123
          %s1125 = smul.addr %s1124, 128
          %s1126 = scalar_lea.hbm %s2, %s1125
          %s1128 = sshll.u32 %s1116, 4
          %s1129 = int_to_ptr.vmem [resolvable:$true] %s1128
          %1131 = dma.vmem_to_hbm [thread:$0]  %s1129, 128, %s1126, %s1113
        $region40: #{tpu_custom_call.1} parent=27 // pred_fallthru
          _
      $region28: #{tpu_custom_call.1} parent=5 // pred_fallthru
        _
      %p1132 = scmp.le.s32.totalorder 2, %s15
      // Predicated region
      $region41: #{tpu_custom_call.1} parent=5 // pred_check
        %p1133 = pneg %p1132
      $region42: #{tpu_custom_call.1} parent=5 // pred_check_branch
        %1135 = sbr.rel (%p1133) target = $region44
      $region43: #{tpu_custom_call.1} parent=5 // pred_region
        %s1136 = ssub.s32 %s15, 2
        // Predicated region
        $region45: #{tpu_custom_call.1} parent=43 // pred_check
          %p1137 = pneg %p107
        $region46: #{tpu_custom_call.1} parent=43 // pred_check_branch
          %1139 = sbr.rel (%p1137) target = $region48
        $region47: #{tpu_custom_call.1} parent=43 // pred_region
          %s1140 = sand.u32 %s92, 1
          %s1141 = scalar_lea.sflag [#allocation5], %s1140
          %s1142 = sand.u32 %s92, 1
          %s1143 = smul.addr %s1142, 8
          %s1144 = scalar_lea.vmem [#allocation8], %s1143
          %1145 = dma.done %s1141, 128
        $region48: #{tpu_custom_call.1} parent=43 // pred_fallthru
          _
      $region44: #{tpu_custom_call.1} parent=5 // pred_fallthru
        _
    $region6: #{tpu_custom_call.1} parent=1 // loop_footer
      %s19 = sadd.s32 1, %s15
    $region7: #{tpu_custom_call.1} parent=1 // loop_footer_branch
      %14 = sbr.rel target = $region3
    $region8: #{tpu_custom_call.1} parent=1 // loop_exit
      _
    %1146 = vsyncpa [#allocation4], 1
    %s1147 = scalar_lea.sflag [#allocation4], 1
    %1148 = vsyncpa %s1147, 1
    %1149 = vsyncpa [#allocation7], 1
    %1150 = vsyncpa [#allocation5], 1
    %s1151 = scalar_lea.sflag [#allocation5], 1
    %1152 = vsyncpa %s1151, 1

</llo_original>
